<compile_context>
chip_gen: v6e
topology: v6e:2x2x1
jax: 0.10.0
libtpu: 0.0.40
codegen_flags: <defaults>
</compile_context>

<pallas_src>
import functools

import jax
import jax.numpy as jnp
from jax.experimental import pallas as pl
from jax.experimental.pallas import tpu as pltpu


def _round_up(x, m):
    return ((x + m - 1) // m) * m


_MAX_BATCH_TILE = 2048  # multiple of 512: satisfies 128-row (v5e) and 256-row (v6e/v7x) MXU


def baseline_net_kernel(x_ref, w1_ref, b1_ref, w2_ref, b2_ref, w3_ref, b3_ref,
                        out_ref, *, compute_dtype):
    """Fused 3-layer MLP hot path for one batch tile."""
    # Optional in-kernel bf16 cast (kept off the HBM path; VPU work hidden
    # under the x-stream DMA).
    x = x_ref[...].astype(compute_dtype)

    # Layer 1: Linear(state_dim, dff) + ReLU   (MXU matmul, f32 accumulation)
    h = jnp.dot(x, w1_ref[...], preferred_element_type=jnp.float32) + b1_ref[...]
    h = jnp.maximum(h, 0.0)

    # Layer 2: Linear(dff, dff) + ReLU
    h = jnp.dot(h.astype(compute_dtype), w2_ref[...],
                preferred_element_type=jnp.float32) + b2_ref[...]
    h = jnp.maximum(h, 0.0)

    # Output head: Linear(dff, 1).  An N=1 matmul wastes a full MXU pass, so
    # compute it as a VPU multiply + lane (XLU) reduction against w3 stored as
    # a (1, dff) row.  b3 is a scalar in SMEM.  The result is written
    # lane-dense as a (1, batch_tile) row -> unmasked full-lane stores.
    row = jnp.sum(h * w3_ref[...], axis=-1) + b3_ref[0, 0]      # (batch_tile,)
    out_ref[...] = row[None, :].astype(out_ref.dtype)


def _pick_batch_tile(batch):
    # Small/medium batches: one grid step covering the whole (8-aligned) batch.
    if batch <= _MAX_BATCH_TILE:
        return max(_round_up(batch, 8), 8)
    # Large batches: pick a 256-row-multiple tile minimizing
    #   (per-TC steps on v7x, odd tile count, total steps, tail waste).
    best = None
    for tile in range(256, _MAX_BATCH_TILE + 1, 256):
        n = -(-batch // tile)          # grid steps
        per_tc = -(-n // 2)            # v7x: "parallel" axis sharded over 2 TCs
        waste = n * tile - batch       # tail rows of wasted compute
        key = (per_tc, n % 2, n, waste)
        if best is None or key < best[0]:
            best = (key, tile)
    return best[1]


def baseline_net_forward(x, params, *, batch_tile=None, use_bf16=False):
    """x: (B, state_dim) float32.  Returns (B, 1) float32 (BaselineNet.forward)."""
    B, state_dim = x.shape
    w1, b1 = params["w1"], params["b1"]
    w2, b2 = params["w2"], params["b2"]
    w3, b3 = params["w3"], params["b3"]
    dff = w1.shape[1]

    if batch_tile is None:
        batch_tile = _pick_batch_tile(B)
    num_tiles = -(-B // batch_tile)        # grid = cdiv(B, tile); NO jnp.pad of x
    out_cols = num_tiles * batch_tile      # tiny over-allocation -> unmasked stores

    compute_dtype = jnp.bfloat16 if use_bf16 else jnp.float32
    if use_bf16:
        # One-time weight casts only; x is cast inside the kernel.
        w1 = w1.astype(jnp.bfloat16)
        w2 = w2.astype(jnp.bfloat16)

    b1 = b1.reshape(1, dff).astype(jnp.float32)
    b2 = b2.reshape(1, dff).astype(jnp.float32)
    w3_row = w3.reshape(1, dff).astype(jnp.float32)   # head weight as a lane row
    b3 = b3.reshape(1, 1).astype(jnp.float32)

    full = lambda shape: pl.BlockSpec(shape, lambda i: (0, 0))  # VMEM-resident

    out = pl.pallas_call(
        functools.partial(baseline_net_kernel, compute_dtype=compute_dtype),
        out_shape=jax.ShapeDtypeStruct((1, out_cols), jnp.float32),
        grid_spec=pltpu.PrefetchScalarGridSpec(
            num_scalar_prefetch=0,
            grid=(num_tiles,),
            in_specs=[
                pl.BlockSpec((batch_tile, state_dim), lambda i: (i, 0)),  # x tile
                full((state_dim, dff)),                                   # w1
                full((1, dff)),                                           # b1
                full((dff, dff)),                                         # w2
                full((1, dff)),                                           # b2
                full((1, dff)),                                           # w3 row
                pl.BlockSpec((1, 1), lambda i: (0, 0),
                             memory_space=pltpu.SMEM),                    # b3 scalar
            ],
            out_specs=pl.BlockSpec((1, batch_tile), lambda i: (0, i)),    # lane-dense
        ),
        compiler_params=pltpu.CompilerParams(
            dimension_semantics=("parallel",)),
    )(x, w1, b1, w2, b2, w3_row, b3)

    # Back to the module's (B, 1) layout; drop lanes past B (tail-tile garbage).
    return out[0, :B][:, None]


def init_params(key, state_dim, dim_feedforward):
    """Deterministic synthetic init (shapes from BaselineNet.__init__ with
    num_stacked_layers=2)."""
    k1, k2, k3, k4, k5, k6 = jax.random.split(key, 6)
    scale1 = 1.0 / jnp.sqrt(state_dim)
    scale2 = 1.0 / jnp.sqrt(dim_feedforward)
    return {
        "w1": jax.random.uniform(k1, (state_dim, dim_feedforward),
                                 jnp.float32, -scale1, scale1),
        "b1": jax.random.uniform(k2, (1, dim_feedforward),
                                 jnp.float32, -scale1, scale1),
        "w2": jax.random.uniform(k3, (dim_feedforward, dim_feedforward),
                                 jnp.float32, -scale2, scale2),
        "b2": jax.random.uniform(k4, (1, dim_feedforward),
                                 jnp.float32, -scale2, scale2),
        "w3": jax.random.uniform(k5, (dim_feedforward, 1),
                                 jnp.float32, -scale2, scale2),
        "b3": jax.random.uniform(k6, (1, 1),
                                 jnp.float32, -scale2, scale2),
    }


def reference_forward(x, params):
    h = jnp.maximum(x @ params["w1"] + params["b1"], 0.0)
    h = jnp.maximum(h @ params["w2"] + params["b2"], 0.0)
    return h @ params["w3"] + params["b3"]


if __name__ == "__main__":
    # Small shapes consistent with the module: batch=8, state_dim=32,
    # dim_feedforward=64, num_stacked_layers=2.
    B, STATE_DIM, DFF = 8, 32, 64

    key = jax.random.PRNGKey(0)
    kx, kx2, kp = jax.random.split(key, 3)
    params = init_params(kp, STATE_DIM, DFF)

    # 1) Small single-tile case (block == full array).
    x = jax.random.normal(kx, (B, STATE_DIM), jnp.float32)
    out = jax.block_until_ready(baseline_net_forward(x, params))
    ref = reference_forward(x, params)
    assert out.shape == (B, 1), out.shape
    assert jnp.allclose(out, ref, atol=1e-4, rtol=1e-4), "f32 small-batch mismatch"

    # 2) Multi-tile case: exercises the padless cdiv grid, the parallel batch
    #    axis (2 tiles -> both v7x TensorCores), a partial last x block, and
    #    the lane-dense multi-block output path.
    B2 = 2500
    x2 = jax.random.normal(kx2, (B2, STATE_DIM), jnp.float32)
    out2 = jax.block_until_ready(baseline_net_forward(x2, params))
    ref2 = reference_forward(x2, params)
    assert out2.shape == (B2, 1), out2.shape
    assert jnp.allclose(out2, ref2, atol=1e-4, rtol=1e-4), "f32 multi-tile mismatch"

    # 3) bf16 MXU operands (x cast in-kernel, f32 accumulation) -- looser tol.
    out3 = jax.block_until_ready(baseline_net_forward(x2, params, use_bf16=True))
    assert jnp.allclose(out3, ref2, atol=5e-2, rtol=5e-2), "bf16 path mismatch"

    print("KERNEL_OK")
</pallas_src>

<mosaic_0001>
module attributes {stable_mosaic.version = 11 : i64} {
  func.func @baseline_net_kernel(%arg0: i32, %arg1: memref<8x32xf32, #tpu.memory_space<vmem>>, %arg2: memref<32x64xf32, #tpu.memory_space<vmem>>, %arg3: memref<1x64xf32, #tpu.memory_space<vmem>>, %arg4: memref<64x64xf32, #tpu.memory_space<vmem>>, %arg5: memref<1x64xf32, #tpu.memory_space<vmem>>, %arg6: memref<1x64xf32, #tpu.memory_space<vmem>>, %arg7: memref<1x1xf32, #tpu.memory_space<smem>>, %arg8: memref<1x8xf32, #tpu.memory_space<vmem>>) attributes {dimension_semantics = [#tpu.dimension_semantics<parallel>], iteration_bounds = array<i64: 1>, scalar_prefetch = 0 : i64, scratch_operands = 0 : i64, tpu.core_type = #tpu.core_type<tc>, window_params = [{transform_indices = @transform_0, window_bounds = array<i64: 8, 32>}, {pipeline_mode = #tpu.pipeline_mode<synchronous>, transform_indices = @transform_1, window_bounds = array<i64: 32, 64>}, {pipeline_mode = #tpu.pipeline_mode<synchronous>, transform_indices = @transform_2, window_bounds = array<i64: 1, 64>}, {pipeline_mode = #tpu.pipeline_mode<synchronous>, transform_indices = @transform_3, window_bounds = array<i64: 64, 64>}, {pipeline_mode = #tpu.pipeline_mode<synchronous>, transform_indices = @transform_4, window_bounds = array<i64: 1, 64>}, {pipeline_mode = #tpu.pipeline_mode<synchronous>, transform_indices = @transform_5, window_bounds = array<i64: 1, 64>}, {transform_indices = @transform_6, window_bounds = array<i64: 1, 1>}, {transform_indices = @transform_7, window_bounds = array<i64: 1, 8>}]} {
    %c0 = arith.constant 0 : index
    %c0_0 = arith.constant 0 : index
    %0 = vector.load %arg1[%c0, %c0_0] : memref<8x32xf32, #tpu.memory_space<vmem>>, vector<8x32xf32>
    %c0_1 = arith.constant 0 : index
    %c0_2 = arith.constant 0 : index
    %1 = vector.load %arg2[%c0_1, %c0_2] : memref<32x64xf32, #tpu.memory_space<vmem>>, vector<32x64xf32>
    %cst = arith.constant dense<0.000000e+00> : vector<8x64xf32>
    %2 = tpu.matmul %0, %1, %cst {dimension_numbers = #tpu.dot_dimension_numbers<[1], [0], [0], [1], [0, 0, 1, 1], [], []>} : vector<8x32xf32>, vector<32x64xf32>, vector<8x64xf32> -> vector<8x64xf32>
    %c0_3 = arith.constant 0 : index
    %c0_4 = arith.constant 0 : index
    %3 = vector.load %arg3[%c0_3, %c0_4] : memref<1x64xf32, #tpu.memory_space<vmem>>, vector<1x64xf32>
    %4 = vector.broadcast %3 : vector<1x64xf32> to vector<8x64xf32>
    %5 = arith.addf %2, %4 : vector<8x64xf32>
    %cst_5 = arith.constant 0.000000e+00 : f32
    %6 = vector.broadcast %cst_5 : f32 to vector<8x64xf32>
    %7 = arith.maximumf %5, %6 : vector<8x64xf32>
    %c0_6 = arith.constant 0 : index
    %c0_7 = arith.constant 0 : index
    %8 = vector.load %arg4[%c0_6, %c0_7] : memref<64x64xf32, #tpu.memory_space<vmem>>, vector<64x64xf32>
    %cst_8 = arith.constant dense<0.000000e+00> : vector<8x64xf32>
    %9 = tpu.matmul %7, %8, %cst_8 {dimension_numbers = #tpu.dot_dimension_numbers<[1], [0], [0], [1], [0, 0, 1, 1], [], []>} : vector<8x64xf32>, vector<64x64xf32>, vector<8x64xf32> -> vector<8x64xf32>
    %c0_9 = arith.constant 0 : index
    %c0_10 = arith.constant 0 : index
    %10 = vector.load %arg5[%c0_9, %c0_10] : memref<1x64xf32, #tpu.memory_space<vmem>>, vector<1x64xf32>
    %11 = vector.broadcast %10 : vector<1x64xf32> to vector<8x64xf32>
    %12 = arith.addf %9, %11 : vector<8x64xf32>
    %cst_11 = arith.constant 0.000000e+00 : f32
    %13 = vector.broadcast %cst_11 : f32 to vector<8x64xf32>
    %14 = arith.maximumf %12, %13 : vector<8x64xf32>
    %c0_12 = arith.constant 0 : index
    %c0_13 = arith.constant 0 : index
    %15 = vector.load %arg6[%c0_12, %c0_13] : memref<1x64xf32, #tpu.memory_space<vmem>>, vector<1x64xf32>
    %16 = vector.broadcast %15 : vector<1x64xf32> to vector<8x64xf32>
    %17 = arith.mulf %14, %16 : vector<8x64xf32>
    %cst_14 = arith.constant dense<0.000000e+00> : vector<8xf32>
    %18 = vector.multi_reduction <add>, %17, %cst_14 [1] : vector<8x64xf32> to vector<8xf32>
    %c0_15 = arith.constant 0 : index
    %c0_16 = arith.constant 0 : index
    %19 = memref.load %arg7[%c0_15, %c0_16] : memref<1x1xf32, #tpu.memory_space<smem>>
    %20 = vector.broadcast %19 : f32 to vector<8xf32>
    %21 = arith.addf %18, %20 : vector<8xf32>
    %22 = vector.shape_cast %21 : vector<8xf32> to vector<1x8xf32>
    %c0_17 = arith.constant 0 : index
    %c0_18 = arith.constant 0 : index
    %23 = vector.load %arg8[%c0_17, %c0_18] : memref<1x8xf32, #tpu.memory_space<vmem>>, vector<1x8xf32>
    tpu.vector_store %arg8[%c0_17, %c0_18], %22 {strides = array<i32>} : memref<1x8xf32, #tpu.memory_space<vmem>>, vector<1x8xf32>,
    return
  }
  func.func @transform_0(%arg0: i32) -> (i32, i32) {
    %c0_i32 = arith.constant 0 : i32
    %c0_i32_0 = arith.constant 0 : i32
    return %arg0, %c0_i32 : i32, i32
  }
  func.func @transform_1(%arg0: i32) -> (i32, i32) {
    %c0_i32 = arith.constant 0 : i32
    %c0_i32_0 = arith.constant 0 : i32
    %c0_i32_1 = arith.constant 0 : i32
    return %c0_i32, %c0_i32_0 : i32, i32
  }
  func.func @transform_2(%arg0: i32) -> (i32, i32) {
    %c0_i32 = arith.constant 0 : i32
    %c0_i32_0 = arith.constant 0 : i32
    %c0_i32_1 = arith.constant 0 : i32
    return %c0_i32, %c0_i32_0 : i32, i32
  }
  func.func @transform_3(%arg0: i32) -> (i32, i32) {
    %c0_i32 = arith.constant 0 : i32
    %c0_i32_0 = arith.constant 0 : i32
    %c0_i32_1 = arith.constant 0 : i32
    return %c0_i32, %c0_i32_0 : i32, i32
  }
  func.func @transform_4(%arg0: i32) -> (i32, i32) {
    %c0_i32 = arith.constant 0 : i32
    %c0_i32_0 = arith.constant 0 : i32
    %c0_i32_1 = arith.constant 0 : i32
    return %c0_i32, %c0_i32_0 : i32, i32
  }
  func.func @transform_5(%arg0: i32) -> (i32, i32) {
    %c0_i32 = arith.constant 0 : i32
    %c0_i32_0 = arith.constant 0 : i32
    %c0_i32_1 = arith.constant 0 : i32
    return %c0_i32, %c0_i32_0 : i32, i32
  }
  func.func @transform_6(%arg0: i32) -> (i32, i32) {
    %c0_i32 = arith.constant 0 : i32
    %c0_i32_0 = arith.constant 0 : i32
    %c0_i32_1 = arith.constant 0 : i32
    return %c0_i32, %c0_i32_0 : i32, i32
  }
  func.func @transform_7(%arg0: i32) -> (i32, i32) {
    %c0_i32 = arith.constant 0 : i32
    %c0_i32_0 = arith.constant 0 : i32
    return %c0_i32, %arg0 : i32, i32
  }
}

</mosaic_0001>

<llo_original>
// kernel: tpu_custom_call.1
$region0: #{tpu_custom_call.1}
  #allocation0 [shape = 'u32[]', space=smem, size = 0x4, offset = 0x4, fixed_abs, tag = 'smem constant byte address 0x4 - core index']
  #allocation1 [shape = 'u32[144,128]{1,0:T(1,128)}', space=vmem, size = 0x12000, scoped, tag = 'internal scratch']
  #allocation2 [shape = 'f32[1,1]{1,0:T(1,128)S(6)}', space=smem, size = 0x200, scoped, tag = 'scoped memory for tpu_custom_call.1']
  %s0 = inlined_call_operand.hbm [shape: f32[8,32], index: 0, kind: input, shape index: {}]
  %s1 = inlined_call_operand.hbm [shape: f32[32,64], index: 1, kind: input, shape index: {}]
  %s2 = inlined_call_operand.vmem [shape: f32[1,64], index: 2, kind: input, shape index: {}]
  %s3 = inlined_call_operand.hbm [shape: f32[64,64], index: 3, kind: input, shape index: {}]
  %s4 = inlined_call_operand.vmem [shape: f32[1,64], index: 4, kind: input, shape index: {}]
  %s5 = inlined_call_operand.vmem [shape: f32[1,64], index: 5, kind: input, shape index: {}]
  %s6 = inlined_call_operand.<no memory space> [shape: f32[1,1], index: 6, kind: input, shape index: {}]
  %s7 = inlined_call_operand.hbm [shape: f32[1,8], index: 7, kind: output, shape index: {}]
  %s8 = sld [smem:[#allocation0]]
  $region50: #{tpu_custom_call.1} parent=0
    _
  %s10 = ssub.s32 1, %s8
  %s11 = scalar_select 0, %s10, %s8
  %12 = sst [smem:[#allocation2]] %s6
  $region1: #{tpu_custom_call.1} parent=0
    #allocation3 [shape = 'u8[4096]{0}', space=vmem, size = 0x1000, scoped, tag = 'input window, operand 0, single buffered']
    #allocation4 [shape = 's32[1]{0}', space=sflag, size = 0x4, scoped, tag = 'scoped memory for tpu_custom_call.1']
    #allocation5 [shape = 's32[1]{0}', space=sflag, size = 0x4, scoped, tag = 'scoped memory for tpu_custom_call.1']
    #allocation6 [shape = 'u8[16384]{0}', space=vmem, size = 0x4000, scoped, tag = 'input window, operand 1, single buffered']
    #allocation7 [shape = 's32[1]{0}', space=sflag, size = 0x4, scoped, tag = 'scoped memory for tpu_custom_call.1']
    #allocation8 [shape = 'u8[32768]{0}', space=vmem, size = 0x8000, scoped, tag = 'input window, operand 3, single buffered']
    #allocation9 [shape = 'u8[512]{0}', space=vmem, size = 0x400, scoped, tag = 'output window, operand 0, single buffered']
    %13 = vsyncpa [#allocation4], 0
    %14 = vsyncpa [#allocation7], 0
    %15 = vsyncpa [#allocation5], 0
    // Predicated region
    $region2: #{tpu_custom_call.1} parent=1 // pred_check
      _
    $region3: #{tpu_custom_call.1} parent=1 // pred_check_branch
      %17 = sbr.rel (0) target = $region5
    $region4: #{tpu_custom_call.1} parent=1 // pred_region
      %s19 = ssub.s32 128, 128
      %20 = vsyncadd [#allocation4], %s19
      %s22 = sshll.u32 [#allocation3], 4
      %s23 = int_to_ptr.vmem [resolvable:$true] %s22
      %25 = dma.hbm_to_vmem [thread:$0]  %s0, 128, %s23, [#allocation4]
    $region5: #{tpu_custom_call.1} parent=1 // pred_fallthru
      _
    // Predicated region
    $region6: #{tpu_custom_call.1} parent=1 // pred_check
      _
    $region7: #{tpu_custom_call.1} parent=1 // pred_check_branch
      %27 = sbr.rel (0) target = $region9
    $region8: #{tpu_custom_call.1} parent=1 // pred_region
      %s29 = ssub.s32 512, 512
      %30 = vsyncadd [#allocation7], %s29
      %s31 = sshll.u32 [#allocation6], 4
      %s32 = int_to_ptr.vmem [resolvable:$true] %s31
      %37 = dma.hbm_to_vmem [thread:$0]  %s1, 512, %s32, [#allocation7], 128, 128, 8
    $region9: #{tpu_custom_call.1} parent=1 // pred_fallthru
      _
    // Predicated region
    $region10: #{tpu_custom_call.1} parent=1 // pred_check
      _
    $region11: #{tpu_custom_call.1} parent=1 // pred_check_branch
      %39 = sbr.rel (0) target = $region13
    $region12: #{tpu_custom_call.1} parent=1 // pred_region
      _
    $region13: #{tpu_custom_call.1} parent=1 // pred_fallthru
      _
    // Predicated region
    $region14: #{tpu_custom_call.1} parent=1 // pred_check
      _
    $region15: #{tpu_custom_call.1} parent=1 // pred_check_branch
      %41 = sbr.rel (0) target = $region17
    $region16: #{tpu_custom_call.1} parent=1 // pred_region
      %s43 = ssub.s32 1024, 1024
      %44 = vsyncadd [#allocation7], %s43
      %s45 = sshll.u32 [#allocation8], 4
      %s46 = int_to_ptr.vmem [resolvable:$true] %s45
      %51 = dma.hbm_to_vmem [thread:$0]  %s3, 1024, %s46, [#allocation7], 128, 128, 8
    $region17: #{tpu_custom_call.1} parent=1 // pred_fallthru
      _
    // Predicated region
    $region18: #{tpu_custom_call.1} parent=1 // pred_check
      _
    $region19: #{tpu_custom_call.1} parent=1 // pred_check_branch
      %53 = sbr.rel (0) target = $region21
    $region20: #{tpu_custom_call.1} parent=1 // pred_region
      _
    $region21: #{tpu_custom_call.1} parent=1 // pred_fallthru
      _
    // Predicated region
    $region22: #{tpu_custom_call.1} parent=1 // pred_check
      _
    $region23: #{tpu_custom_call.1} parent=1 // pred_check_branch
      %55 = sbr.rel (0) target = $region25
    $region24: #{tpu_custom_call.1} parent=1 // pred_region
      _
    $region25: #{tpu_custom_call.1} parent=1 // pred_fallthru
      _
    // Predicated region
    $region26: #{tpu_custom_call.1} parent=1 // pred_check
      _
    $region27: #{tpu_custom_call.1} parent=1 // pred_check_branch
      %57 = sbr.rel (0) target = $region29
    $region28: #{tpu_custom_call.1} parent=1 // pred_region
      _
    $region29: #{tpu_custom_call.1} parent=1 // pred_fallthru
      _
    // Predicated region
    $region30: #{tpu_custom_call.1} parent=1 // pred_check
      _
    $region31: #{tpu_custom_call.1} parent=1 // pred_check_branch
      %59 = sbr.rel (0) target = $region33
    $region32: #{tpu_custom_call.1} parent=1 // pred_region
      %60 = dma.done [#allocation4], 128
    $region33: #{tpu_custom_call.1} parent=1 // pred_fallthru
      _
    // Predicated region
    $region34: #{tpu_custom_call.1} parent=1 // pred_check
      _
    $region35: #{tpu_custom_call.1} parent=1 // pred_check_branch
      %62 = sbr.rel (0) target = $region37
    $region36: #{tpu_custom_call.1} parent=1 // pred_region
      %63 = dma.done [#allocation7], 512
    $region37: #{tpu_custom_call.1} parent=1 // pred_fallthru
      _
    // Predicated region
    $region38: #{tpu_custom_call.1} parent=1 // pred_check
      _
    $region39: #{tpu_custom_call.1} parent=1 // pred_check_branch
      %65 = sbr.rel (0) target = $region41
    $region40: #{tpu_custom_call.1} parent=1 // pred_region
      %66 = dma.done [#allocation7], 1024
    $region41: #{tpu_custom_call.1} parent=1 // pred_fallthru
      _
    %v67 = vld [vmem:[#allocation3] sm:$0xff]
    %v68 = vld [vmem:[#allocation6] sm:$0xff]
    %v69 = vld [vmem:[#allocation6 + $0x8] sm:$0xff]
    %v70 = vld [vmem:[#allocation6 + $0x10] sm:$0xff]
    %v71 = vld [vmem:[#allocation6 + $0x18] sm:$0xff]
    %v72 = vld [vmem:[%s2] sm:$0x1]
    %v74 = vlaneseq
    %v75 = vshrl.u32 %v74, 7
    %v76 = vsub.s32 0, %v75
    %v77 = vrot.slane %v72, %v76
    %vm79 = vcmask 261120
    %v81 = vsel %vm79, %v67, 0
    %83 = vmatprep.subr.mxu0 0.0
    %84 = vmatpush1.msra.mxu0 0.0
    %85 = vmatprep.subr.mxu0 0.0
    %86 = vmatpush1.msra.mxu0 0.0
    %87 = vmatprep.subr.mxu0 0.0
    %88 = vmatpush1.msra.mxu0 0.0
    %89 = vmatprep.subr.mxu0 0.0
    %90 = vmatpush1.msra.mxu0 0.0
    %91 = vmatprep.subr.mxu0 0.0
    %92 = vmatpush1.msra.mxu0 0.0
    %93 = vmatprep.subr.mxu0 0.0
    %94 = vmatpush1.msra.mxu0 0.0
    %95 = vmatprep.subr.mxu0 0.0
    %96 = vmatpush1.msra.mxu0 0.0
    %97 = vmatprep.subr.mxu0 0.0
    %98 = vmatpush1.msra.mxu0 0.0
    %99 = vmatprep.subr.mxu0 0.0
    %100 = vmatpush1.msra.mxu0 0.0
    %101 = vmatprep.subr.mxu0 0.0
    %102 = vmatpush1.msra.mxu0 0.0
    %103 = vmatprep.subr.mxu0 0.0
    %104 = vmatpush1.msra.mxu0 0.0
    %105 = vmatprep.subr.mxu0 0.0
    %106 = vmatpush1.msra.mxu0 0.0
    %107 = vmatprep.subr.mxu0 0.0
    %108 = vmatpush1.msra.mxu0 %v71
    %109 = vmatprep.subr.mxu0 0.0
    %110 = vmatpush1.msra.mxu0 %v70
    %111 = vmatprep.subr.mxu0 0.0
    %112 = vmatpush1.msra.mxu0 %v69
    %113 = vmatprep.subr.mxu0 0.0
    %114 = vmatpush1.msra.mxu0 %v68
    %115 = vmatprep.subr.mxu0 0.0
    %116 = vmatpush2.msra.mxu0 0.0
    %117 = vmatprep.subr.mxu0 0.0
    %118 = vmatpush2.msra.mxu0 0.0
    %119 = vmatprep.subr.mxu0 0.0
    %120 = vmatpush2.msra.mxu0 0.0
    %121 = vmatprep.subr.mxu0 0.0
    %122 = vmatpush2.msra.mxu0 0.0
    %123 = vmatprep.subr.mxu0 0.0
    %124 = vmatpush2.msra.mxu0 0.0
    %125 = vmatprep.subr.mxu0 0.0
    %126 = vmatpush2.msra.mxu0 0.0
    %127 = vmatprep.subr.mxu0 0.0
    %128 = vmatpush2.msra.mxu0 0.0
    %129 = vmatprep.subr.mxu0 0.0
    %130 = vmatpush2.msra.mxu0 0.0
    %131 = vmatprep.subr.mxu0 0.0
    %132 = vmatpush2.msra.mxu0 0.0
    %133 = vmatprep.subr.mxu0 0.0
    %134 = vmatpush2.msra.mxu0 0.0
    %135 = vmatprep.subr.mxu0 0.0
    %136 = vmatpush2.msra.mxu0 0.0
    %137 = vmatprep.subr.mxu0 0.0
    %138 = vmatpush2.msra.mxu0 0.0
    %139 = vmatprep.subr.mxu0 0.0
    %140 = vmatpush2.msra.mxu0 0.0
    %141 = vmatprep.subr.mxu0 0.0
    %142 = vmatpush2.msra.mxu0 0.0
    %143 = vmatprep.subr.mxu0 0.0
    %144 = vmatpush2.msra.mxu0 0.0
    %145 = vmatprep.subr.mxu0 0.0
    %146 = vmatpush2.msra.mxu0 0.0
    %147 = vmatprep.mubr.f32.mxu0 0.0
    %148 = vmatmul.mubr.f32.gmra.mxu0 %v81
    %v149 = vpop.f32.mrf.mxu0
    %v150 = vadd.f32 %v77, %v149
    %v151 = vpop.f32.mrf.mxu0
    %152 = vdwg.mxu0
    %v153 = vmax.f32 %v150, 0.0
    %v154 = vld [vmem:[#allocation8] sm:$0xff]
    %v155 = vld [vmem:[#allocation8 + $0x8] sm:$0xff]
    %v156 = vld [vmem:[#allocation8 + $0x10] sm:$0xff]
    %v157 = vld [vmem:[#allocation8 + $0x18] sm:$0xff]
    %v158 = vld [vmem:[#allocation8 + $0x20] sm:$0xff]
    %v159 = vld [vmem:[#allocation8 + $0x28] sm:$0xff]
    %v160 = vld [vmem:[#allocation8 + $0x30] sm:$0xff]
    %v161 = vld [vmem:[#allocation8 + $0x38] sm:$0xff]
    %v162 = vld [vmem:[%s4] sm:$0x1]
    %v164 = vlaneseq
    %v165 = vshrl.u32 %v164, 7
    %v166 = vsub.s32 0, %v165
    %v167 = vrot.slane %v162, %v166
    %vm169 = vcmask 523264
    %v171 = vsel %vm169, %v153, 0
    %173 = vmatprep.subr.mxu0 0.0
    %174 = vmatpush1.msra.mxu0 0.0
    %175 = vmatprep.subr.mxu0 0.0
    %176 = vmatpush1.msra.mxu0 0.0
    %177 = vmatprep.subr.mxu0 0.0
    %178 = vmatpush1.msra.mxu0 0.0
    %179 = vmatprep.subr.mxu0 0.0
    %180 = vmatpush1.msra.mxu0 0.0
    %181 = vmatprep.subr.mxu0 0.0
    %182 = vmatpush1.msra.mxu0 0.0
    %183 = vmatprep.subr.mxu0 0.0
    %184 = vmatpush1.msra.mxu0 0.0
    %185 = vmatprep.subr.mxu0 0.0
    %186 = vmatpush1.msra.mxu0 0.0
    %187 = vmatprep.subr.mxu0 0.0
    %188 = vmatpush1.msra.mxu0 0.0
    %189 = vmatprep.subr.mxu0 0.0
    %190 = vmatpush1.msra.mxu0 %v161
    %191 = vmatprep.subr.mxu0 0.0
    %192 = vmatpush1.msra.mxu0 %v160
    %193 = vmatprep.subr.mxu0 0.0
    %194 = vmatpush1.msra.mxu0 %v159
    %195 = vmatprep.subr.mxu0 0.0
    %196 = vmatpush1.msra.mxu0 %v158
    %197 = vmatprep.subr.mxu0 0.0
    %198 = vmatpush1.msra.mxu0 %v157
    %199 = vmatprep.subr.mxu0 0.0
    %200 = vmatpush1.msra.mxu0 %v156
    %201 = vmatprep.subr.mxu0 0.0
    %202 = vmatpush1.msra.mxu0 %v155
    %203 = vmatprep.subr.mxu0 0.0
    %204 = vmatpush1.msra.mxu0 %v154
    %205 = vmatprep.subr.mxu0 0.0
    %206 = vmatpush2.msra.mxu0 0.0
    %207 = vmatprep.subr.mxu0 0.0
    %208 = vmatpush2.msra.mxu0 0.0
    %209 = vmatprep.subr.mxu0 0.0
    %210 = vmatpush2.msra.mxu0 0.0
    %211 = vmatprep.subr.mxu0 0.0
    %212 = vmatpush2.msra.mxu0 0.0
    %213 = vmatprep.subr.mxu0 0.0
    %214 = vmatpush2.msra.mxu0 0.0
    %215 = vmatprep.subr.mxu0 0.0
    %216 = vmatpush2.msra.mxu0 0.0
    %217 = vmatprep.subr.mxu0 0.0
    %218 = vmatpush2.msra.mxu0 0.0
    %219 = vmatprep.subr.mxu0 0.0
    %220 = vmatpush2.msra.mxu0 0.0
    %221 = vmatprep.subr.mxu0 0.0
    %222 = vmatpush2.msra.mxu0 0.0
    %223 = vmatprep.subr.mxu0 0.0
    %224 = vmatpush2.msra.mxu0 0.0
    %225 = vmatprep.subr.mxu0 0.0
    %226 = vmatpush2.msra.mxu0 0.0
    %227 = vmatprep.subr.mxu0 0.0
    %228 = vmatpush2.msra.mxu0 0.0
    %229 = vmatprep.subr.mxu0 0.0
    %230 = vmatpush2.msra.mxu0 0.0
    %231 = vmatprep.subr.mxu0 0.0
    %232 = vmatpush2.msra.mxu0 0.0
    %233 = vmatprep.subr.mxu0 0.0
    %234 = vmatpush2.msra.mxu0 0.0
    %235 = vmatprep.subr.mxu0 0.0
    %236 = vmatpush2.msra.mxu0 0.0
    %237 = vmatprep.mubr.f32.mxu0 0.0
    %238 = vmatmul.mubr.f32.gmra.mxu0 %v171
    %v239 = vpop.f32.mrf.mxu0
    %v240 = vadd.f32 %v167, %v239
    %v241 = vpop.f32.mrf.mxu0
    %242 = vdwg.mxu0
    %v243 = vmax.f32 %v240, 0.0
    %v244 = vld [vmem:[%s5] sm:$0x1]
    %v246 = vlaneseq
    %v247 = vshrl.u32 %v246, 7
    %v248 = vsub.s32 0, %v247
    %v249 = vrot.slane %v244, %v248
    %v251 = vmul.f32 %v243, %v249
    %v252 = vsel %vm169, %v251, 0.0
    %253 = vadd.xlane.f32.xlu0 %v252
    %v254 = vpop.xlane.xlu0 %253
    %s255 = sld [smem:[#allocation2]]
    %v256 = vstv %s255
    %v257 = vadd.f32 %v254, %v256
    %v259 = vlaneseq
    %v260 = vand.u32 %v259, 127
    %v261 = vlaneseq
    %v262 = vshrl.u32 %v261, 7
    %v263 = vsub.s32 %v260, %v262
    %v264 = vrot.slane %v257, %v263
    %vm266 = vcmask 57344
    %267 = vst.msk [vmem:[#allocation9] sm:$0x1] %vm266, %v264
    // Predicated region
    $region42: #{tpu_custom_call.1} parent=1 // pred_check
      _
    $region43: #{tpu_custom_call.1} parent=1 // pred_check_branch
      %269 = sbr.rel (0) target = $region45
    $region44: #{tpu_custom_call.1} parent=1 // pred_region
      %s271 = ssub.s32 16, 16
      %272 = vsyncadd [#allocation5], %s271
      %s274 = sshll.u32 [#allocation9], 4
      %s275 = int_to_ptr.vmem [resolvable:$true] %s274
      %277 = dma.vmem_to_hbm [thread:$0]  %s275, 16, %s7, [#allocation5]
    $region45: #{tpu_custom_call.1} parent=1 // pred_fallthru
      _
    // Predicated region
    $region46: #{tpu_custom_call.1} parent=1 // pred_check
      _
    $region47: #{tpu_custom_call.1} parent=1 // pred_check_branch
      %279 = sbr.rel (0) target = $region49
    $region48: #{tpu_custom_call.1} parent=1 // pred_region
      %280 = dma.done [#allocation5], 16
    $region49: #{tpu_custom_call.1} parent=1 // pred_fallthru
      _
    %281 = vsyncpa [#allocation4], 1
    %282 = vsyncpa [#allocation7], 1
    %283 = vsyncpa [#allocation5], 1

</llo_original>
